<compile_context>
chip_gen: v7x
topology: tpu7x:2x2x1
jax: 0.10.0
libtpu: 0.0.40
codegen_flags: <defaults>
</compile_context>

<pallas_src>
import jax
import jax.numpy as jnp
from jax.experimental import pallas as pl
from jax.experimental.pallas import tpu as pltpu

LANE_W = 1024                 # lane-dense slab width: 8 vregs wide -> unmasked vld/vst
_SUBLANE = 8
_MIN_PALLAS_BYTES = 1 << 19   # below ~512 KiB, plain XLA exp is faster & fusible


def _exp_kernel(x_ref, o_ref):
    # Elementwise exp on the whole VMEM tile (EUP transcendental slot).
    o_ref[...] = jnp.exp(x_ref[...])


def exponential(x: jax.Array, *,
                target_block_bytes: int = 2 << 20,
                min_pallas_bytes: int = _MIN_PALLAS_BYTES) -> jax.Array:
    """Elementwise exp via a Pallas TPU kernel. Matches torch.exp(x)."""
    n = x.size
    if n == 0:
        return jnp.exp(x)
    itemsize = jnp.dtype(x.dtype).itemsize
    if n * itemsize < min_pallas_bytes:
        # Small-input fast path: pallas_call launch + pipeline prologue dominates.
        return jnp.exp(x)

    orig_shape = x.shape
    dtype = x.dtype

    # Flatten to a lane-dense (rows, 1024) slab. Pad only up to one slab row
    # (1024 elements); typical NCHW conv activations need no pad at all.
    x_flat = x.reshape(-1)
    padded_n = pl.cdiv(n, LANE_W) * LANE_W
    if padded_n != n:
        x_flat = jnp.pad(x_flat, (0, padded_n - n))
    rows = padded_n // LANE_W
    x2d = x_flat.reshape(rows, LANE_W)

    # Block sizing: ~target_block_bytes per block (HBM roofline plateau is
    # ~1-4 MiB), capped so 2 buffers x (in + out) = 4x block stays well under
    # the most conservative scoped-VMEM default (16 MiB on v5e).
    bytes_per_row = LANE_W * itemsize
    max_block_bytes = (14 << 20) // 4
    block_bytes = min(target_block_bytes, max_block_bytes)
    tile_rows = max(_SUBLANE, (block_bytes // bytes_per_row) // _SUBLANE * _SUBLANE)
    if tile_rows >= rows:
        tile_rows = rows                      # single block == full array dims
        grid = (1,)
    else:
        grid = (pl.cdiv(rows, tile_rows),)    # boundary block may be partial (masked)

    y2d = pl.pallas_call(
        _exp_kernel,
        out_shape=jax.ShapeDtypeStruct((rows, LANE_W), dtype),
        grid_spec=pltpu.PrefetchScalarGridSpec(
            num_scalar_prefetch=0,
            grid=grid,
            in_specs=[pl.BlockSpec((tile_rows, LANE_W), lambda i: (i, 0))],
            out_specs=pl.BlockSpec((tile_rows, LANE_W), lambda i: (i, 0)),
        ),
        compiler_params=pltpu.CompilerParams(
            dimension_semantics=("parallel",),   # shards grid over both TCs on v7x
        ),
        cost_estimate=pl.CostEstimate(
            flops=0,
            transcendentals=padded_n,
            bytes_accessed=2 * padded_n * itemsize,
        ),
    )(x2d)

    y_flat = y2d.reshape(-1)
    if padded_n != n:
        y_flat = y_flat[:n]
    return y_flat.reshape(orig_shape)


if __name__ == "__main__":
    key = jax.random.PRNGKey(0)
    k1, k2, k3 = jax.random.split(key, 3)

    # 1) Module-spec shape (NCHW, small) -- forced through the Pallas path.
    x_small = jax.random.normal(k1, (2, 4, 16, 16), dtype=jnp.float32)
    y_small = exponential(x_small, min_pallas_bytes=0)
    jax.block_until_ready(y_small)
    assert y_small.shape == x_small.shape and y_small.dtype == x_small.dtype
    assert jnp.allclose(y_small, jnp.exp(x_small), rtol=1e-6, atol=1e-6)

    # 2) Larger input exercising the default multi-block Pallas path (4 MiB f32).
    x_big = jax.random.normal(k2, (8, 16, 64, 128), dtype=jnp.float32)
    y_big = exponential(x_big)
    jax.block_until_ready(y_big)
    assert jnp.allclose(y_big, jnp.exp(x_big), rtol=1e-6, atol=1e-6)

    # 3) Ragged size -> slab pad + partial boundary block path (small blocks forced).
    x_rag = jax.random.normal(k3, (3, 5, 33, 40), dtype=jnp.float32)
    y_rag = exponential(x_rag, min_pallas_bytes=0, target_block_bytes=8 * 1024 * 4)
    jax.block_until_ready(y_rag)
    assert y_rag.shape == x_rag.shape
    assert jnp.allclose(y_rag, jnp.exp(x_rag), rtol=1e-6, atol=1e-6)

    print("KERNEL_OK")
</pallas_src>

<mosaic_0001>
module attributes {stable_mosaic.version = 11 : i64} {
  func.func @_exp_kernel(%arg0: i32, %arg1: memref<2x1024xf32, #tpu.memory_space<vmem>>, %arg2: memref<2x1024xf32, #tpu.memory_space<vmem>>) attributes {dimension_semantics = [#tpu.dimension_semantics<parallel>], iteration_bounds = array<i64: 1>, scalar_prefetch = 0 : i64, scratch_operands = 0 : i64, tpu.core_type = #tpu.core_type<tc>, window_params = [{transform_indices = @transform_0, window_bounds = array<i64: 2, 1024>}, {transform_indices = @transform_1, window_bounds = array<i64: 2, 1024>}]} {
    %c0 = arith.constant 0 : index
    %c0_0 = arith.constant 0 : index
    %0 = vector.load %arg1[%c0, %c0_0] : memref<2x1024xf32, #tpu.memory_space<vmem>>, vector<2x1024xf32>
    %1 = math.exp %0 : vector<2x1024xf32>
    %c0_1 = arith.constant 0 : index
    %c0_2 = arith.constant 0 : index
    %2 = vector.load %arg2[%c0_1, %c0_2] : memref<2x1024xf32, #tpu.memory_space<vmem>>, vector<2x1024xf32>
    tpu.vector_store %arg2[%c0_1, %c0_2], %1 {strides = array<i32>} : memref<2x1024xf32, #tpu.memory_space<vmem>>, vector<2x1024xf32>,
    return
  }
  func.func @transform_0(%arg0: i32) -> (i32, i32) {
    %c0_i32 = arith.constant 0 : i32
    %c0_i32_0 = arith.constant 0 : i32
    return %arg0, %c0_i32 : i32, i32
  }
  func.func @transform_1(%arg0: i32) -> (i32, i32) {
    %c0_i32 = arith.constant 0 : i32
    %c0_i32_0 = arith.constant 0 : i32
    return %arg0, %c0_i32 : i32, i32
  }
}

</mosaic_0001>

<llo_original>
// kernel: tpu_custom_call.1
$region0: #{tpu_custom_call.1}
  #allocation0 [shape = 'u32[]', space=smem, size = 0x4, offset = 0x4, fixed_abs, tag = 'smem constant byte address 0x4 - core index']
  #allocation1 [shape = 'u32[144,128]{1,0:T(1,128)}', space=vmem, size = 0x12000, scoped, tag = 'internal scratch']
  %s0 = inlined_call_operand.hbm [shape: f32[2,1024], index: 0, kind: input, shape index: {}]
  %s1 = inlined_call_operand.hbm [shape: f32[2,1024], index: 1, kind: output, shape index: {}]
  %s2 = sld [smem:[#allocation0]]
  $region18: #{tpu_custom_call.1} parent=0
    _
  %s4 = ssub.s32 1, %s2
  %s5 = scalar_select 0, %s4, %s2
  $region1: #{tpu_custom_call.1} parent=0
    #allocation2 [shape = 'u8[8192]{0}', space=vmem, size = 0x2000, scoped, tag = 'input window, operand 0, single buffered']
    #allocation3 [shape = 's32[1]{0}', space=sflag, size = 0x4, scoped, tag = 'scoped memory for tpu_custom_call.1']
    #allocation4 [shape = 's32[1]{0}', space=sflag, size = 0x4, scoped, tag = 'scoped memory for tpu_custom_call.1']
    #allocation5 [shape = 'u8[8192]{0}', space=vmem, size = 0x2000, scoped, tag = 'output window, operand 0, single buffered']
    %6 = vsyncpa [#allocation3], 0
    %7 = vsyncpa [#allocation4], 0
    // Predicated region
    $region2: #{tpu_custom_call.1} parent=1 // pred_check
      _
    $region3: #{tpu_custom_call.1} parent=1 // pred_check_branch
      %9 = sbr.rel (0) target = $region5
    $region4: #{tpu_custom_call.1} parent=1 // pred_region
      %s11 = ssub.s32 256, 256
      %12 = vsyncadd [#allocation3], %s11
      %s14 = sshll.u32 [#allocation2], 4
      %s15 = int_to_ptr.vmem [resolvable:$true] %s14
      %17 = dma.hbm_to_vmem [thread:$0]  %s0, 256, %s15, [#allocation3]
    $region5: #{tpu_custom_call.1} parent=1 // pred_fallthru
      _
    // Predicated region
    $region6: #{tpu_custom_call.1} parent=1 // pred_check
      _
    $region7: #{tpu_custom_call.1} parent=1 // pred_check_branch
      %19 = sbr.rel (0) target = $region9
    $region8: #{tpu_custom_call.1} parent=1 // pred_region
      %20 = dma.done [#allocation3], 256
    $region9: #{tpu_custom_call.1} parent=1 // pred_fallthru
      _
    %v21 = vld [vmem:[#allocation2] sm:$0xff]
    %v22 = vld [vmem:[#allocation2 + $0x8] sm:$0xff]
    %v23 = vmul.f32 %v21, 1.442695
    %v24 = vpow.pop %v23
    %v25 = vmul.f32 %v22, 1.442695
    %v26 = vpow.pop %v25
    %27 = vst [vmem:[#allocation5] sm:$0xff] %v24
    %28 = vst [vmem:[#allocation5 + $0x8] sm:$0xff] %v26
    // Predicated region
    $region10: #{tpu_custom_call.1} parent=1 // pred_check
      _
    $region11: #{tpu_custom_call.1} parent=1 // pred_check_branch
      %30 = sbr.rel (0) target = $region13
    $region12: #{tpu_custom_call.1} parent=1 // pred_region
      %s32 = ssub.s32 256, 256
      %33 = vsyncadd [#allocation4], %s32
      %s35 = sshll.u32 [#allocation5], 4
      %s36 = int_to_ptr.vmem [resolvable:$true] %s35
      %38 = dma.vmem_to_hbm [thread:$0]  %s36, 256, %s1, [#allocation4]
    $region13: #{tpu_custom_call.1} parent=1 // pred_fallthru
      _
    // Predicated region
    $region14: #{tpu_custom_call.1} parent=1 // pred_check
      _
    $region15: #{tpu_custom_call.1} parent=1 // pred_check_branch
      %40 = sbr.rel (0) target = $region17
    $region16: #{tpu_custom_call.1} parent=1 // pred_region
      %41 = dma.done [#allocation4], 256
    $region17: #{tpu_custom_call.1} parent=1 // pred_fallthru
      _
    %42 = vsyncpa [#allocation3], 1
    %43 = vsyncpa [#allocation4], 1

</llo_original>
